<compile_context>
chip_gen: v5e
topology: v5e:2x2
jax: 0.10.0
libtpu: 0.0.40
codegen_flags: <defaults>
</compile_context>

<pallas_src>
import functools

import jax
import jax.numpy as jnp
import numpy as np
from jax.experimental import pallas as pl
from jax.experimental.pallas import tpu as pltpu


# ---------------------------------------------------------------------------
# tiling / VMEM helpers
# ---------------------------------------------------------------------------
def _vmem_estimate(Cin, Cout, TH, W, halo):
    """Rough per-step VMEM working set (bytes, f32 accounting, double-buffered)."""
    hwt = TH * W
    L = hwt + 2 * W + 2
    x_blk = Cin * hwt * 4
    o_blk = Cout * hwt * 4
    interm = (Cin + Cout) * L * 4 + 4 * Cout * (hwt + 2) * 4
    param = (Cout * (Cin + 9 + 1) + 2 * hwt) * 4
    nfetch = 3 if halo else 1
    return nfetch * 2 * x_blk + 2 * o_blk + interm + 2 * param


def _pick_row_tile(Cin, Cout, H, W, max_tile_rows=None, budget=12 * 2 ** 20):
    """Rows per tile.

    Prefers the full image (single fetch, no halo refs).  Otherwise the largest
    divisor of H that fits the budget, preferring lane-aligned flat tiles
    (TH*W % 128 == 0)."""
    if (max_tile_rows is None or max_tile_rows >= H) and \
            _vmem_estimate(Cin, Cout, H, W, halo=False) <= budget:
        return H
    cap = H if max_tile_rows is None else min(H, max_tile_rows)
    best = None
    for th in range(1, cap + 1):
        if H % th:
            continue
        if _vmem_estimate(Cin, Cout, th, W, halo=True) > budget:
            continue
        aligned = (th * W) % 128 == 0
        if best is None or (aligned, th) > (best[1], best[0]):
            best = (th, aligned)
    return best[0] if best is not None else 1


# ---------------------------------------------------------------------------
# kernel body (shared by both paths)
# ---------------------------------------------------------------------------
def _lightconv_body(x_c, x_u, x_d, w1_ref, w2_ref, shift_ref, mask_ref, o_ref,
                    TH, W):
    """x_c: (Cin, TH*W) f32 flattened rows of this tile.
    x_u / x_d: (Cin, W) f32 row above / below (already zeroed at image edges).
    w1_ref: (Cout, Cin) bf16; w2_ref: (Cout, 9) f32 (BN scale folded);
    shift_ref: (Cout, 1) f32; mask_ref: (2, TH*W) f32; o_ref: (1, Cout, TH*W)."""
    HWt = TH * W
    cin = x_c.shape[0]

    # Flattened window: [zero col | row above | tile | row below | zero col].
    zc = jnp.zeros((cin, 1), jnp.float32)
    x_win = jnp.concatenate([zc, x_u, x_c, x_d, zc], axis=1)      # (Cin, HWt+2W+2)

    # 1x1 conv: one MXU matmul, bf16 operands, f32 accumulation.  A zero input
    # row stays exactly zero (no bias), so the halo zeros implement H padding.
    y1 = jnp.dot(w1_ref[...], x_win.astype(jnp.bfloat16),
                 preferred_element_type=jnp.float32)              # (Cout, L) f32

    # Depthwise 3x3 (BN scale folded into w2), f32 on the VPU.  Row (dh) shifts
    # are static lane slices of the flattened window; column (dw) shifts are the
    # +0/+1/+2 sub-slices; W edges are zeroed with precomputed masks.
    w2 = w2_ref[...]                                              # (Cout, 9)
    rows = [y1[:, dh * W: dh * W + HWt + 2] for dh in range(3)]   # (Cout, HWt+2)

    def col_group(dw):
        s = rows[0] * w2[:, dw][:, None]
        s = s + rows[1] * w2[:, 3 + dw][:, None]
        s = s + rows[2] * w2[:, 6 + dw][:, None]
        return s[:, dw: dw + HWt]                                 # (Cout, HWt)

    m = mask_ref[...]
    acc = col_group(1) + m[0:1, :] * col_group(0) + m[1:2, :] * col_group(2)

    # Folded BN shift + ReLU, lane-dense store.
    y = acc + shift_ref[...]
    o_ref[0] = jnp.maximum(y, 0.0).astype(o_ref.dtype)


def _lightconv_full_kernel(xc_ref, w1_ref, w2_ref, shift_ref, mask_ref, o_ref,
                           *, TH, W):
    """Full-image tile: no halo refs needed; padding rows are plain zeros."""
    cin = xc_ref.shape[1]
    x_c = xc_ref[0].astype(jnp.float32)
    z = jnp.zeros((cin, W), jnp.float32)
    _lightconv_body(x_c, z, z, w1_ref, w2_ref, shift_ref, mask_ref, o_ref, TH, W)


def _lightconv_halo_kernel(xc_ref, xu_ref, xd_ref, w1_ref, w2_ref, shift_ref,
                           mask_ref, o_ref, *, TH, W):
    """Row-tiled: neighbour tiles supply the 1-row halo (zeroed at image edges)."""
    h = pl.program_id(1)
    n_h = pl.num_programs(1)
    HWt = TH * W
    valid_u = (h > 0).astype(jnp.float32)
    valid_d = (h < n_h - 1).astype(jnp.float32)
    x_c = xc_ref[0].astype(jnp.float32)                           # (Cin, TH*W)
    x_u = xu_ref[0, :, HWt - W:HWt].astype(jnp.float32) * valid_u  # (Cin, W)
    x_d = xd_ref[0, :, 0:W].astype(jnp.float32) * valid_d          # (Cin, W)
    _lightconv_body(x_c, x_u, x_d, w1_ref, w2_ref, shift_ref, mask_ref, o_ref,
                    TH, W)


# ---------------------------------------------------------------------------
# wrapper
# ---------------------------------------------------------------------------
def light_conv3x3(x_nchw, conv1_w, conv2_w, gamma, beta, run_mean, run_var,
                  eps=1e-5, max_tile_rows=None):
    """x_nchw: (N, Cin, H, W); conv1_w: (Cout, Cin, 1, 1);
    conv2_w: (Cout, 1, 3, 3) (groups=Cout).  Returns (N, Cout, H, W).
    BN in inference mode."""
    N, Cin, H, W = x_nchw.shape
    Cout = conv1_w.shape[0]

    # ---- parameter folding (tiny, wrapper side) ----
    w1 = conv1_w[:, :, 0, 0].astype(jnp.bfloat16)                  # (Cout, Cin)
    scale = gamma / jnp.sqrt(run_var + eps)                        # (Cout,)
    shift = (beta - run_mean * scale).reshape(Cout, 1).astype(jnp.float32)
    w2 = (conv2_w[:, 0, :, :].reshape(Cout, 9)
          * scale[:, None]).astype(jnp.float32)                    # (Cout, 9)

    # ---- tiling ----
    TH = _pick_row_tile(Cin, Cout, H, W, max_tile_rows)
    nH = H // TH
    HWt = TH * W

    # W-edge masks for the flattened-row column shifts (compile-time constants).
    col = np.arange(HWt) % W
    masks = jnp.asarray(
        np.stack([(col != 0), (col != W - 1)]).astype(np.float32))  # (2, TH*W)

    # Free layout change: flatten spatial dims (no transpose, no HBM copy).
    x3 = x_nchw.reshape(N, Cin, H * W)

    w_specs = [
        pl.BlockSpec((Cout, Cin), lambda n, h: (0, 0)),
        pl.BlockSpec((Cout, 9), lambda n, h: (0, 0)),
        pl.BlockSpec((Cout, 1), lambda n, h: (0, 0)),
        pl.BlockSpec((2, HWt), lambda n, h: (0, 0)),
    ]

    if nH == 1:
        kernel = functools.partial(_lightconv_full_kernel, TH=TH, W=W)
        in_specs = [pl.BlockSpec((1, Cin, HWt), lambda n, h: (n, 0, h))] + w_specs
        args = (x3, w1, w2, shift, masks)
    else:
        kernel = functools.partial(_lightconv_halo_kernel, TH=TH, W=W)
        in_specs = [
            pl.BlockSpec((1, Cin, HWt), lambda n, h: (n, 0, h)),
            pl.BlockSpec((1, Cin, HWt),
                         lambda n, h: (n, 0, jnp.maximum(h - 1, 0))),
            pl.BlockSpec((1, Cin, HWt),
                         lambda n, h, _nH=nH: (n, 0, jnp.minimum(h + 1, _nH - 1))),
        ] + w_specs
        args = (x3, x3, x3, w1, w2, shift, masks)

    est = _vmem_estimate(Cin, Cout, TH, W, halo=(nH > 1))
    vmem_limit = int(min(48 * 2 ** 20, max(16 * 2 ** 20, 2 * est)))

    out = pl.pallas_call(
        kernel,
        out_shape=jax.ShapeDtypeStruct((N, Cout, H * W), x_nchw.dtype),
        grid_spec=pltpu.PrefetchScalarGridSpec(
            num_scalar_prefetch=0,
            grid=(N, nH),
            in_specs=in_specs,
            out_specs=pl.BlockSpec((1, Cout, HWt), lambda n, h: (n, 0, h)),
        ),
        compiler_params=pltpu.CompilerParams(
            dimension_semantics=("parallel", "parallel"),
            vmem_limit_bytes=vmem_limit,
        ),
    )(*args)

    return out.reshape(N, Cout, H, W)


# ---------------------------------------------------------------------------
# pure-JAX reference
# ---------------------------------------------------------------------------
def _reference(x_nchw, conv1_w, conv2_w, gamma, beta, run_mean, run_var,
               eps=1e-5):
    Cout = conv1_w.shape[0]
    y = jax.lax.conv_general_dilated(
        x_nchw, conv1_w, (1, 1), 'VALID',
        dimension_numbers=('NCHW', 'OIHW', 'NCHW'))
    y = jax.lax.conv_general_dilated(
        y, conv2_w, (1, 1), ((1, 1), (1, 1)),
        feature_group_count=Cout,
        dimension_numbers=('NCHW', 'OIHW', 'NCHW'))
    inv = 1.0 / jnp.sqrt(run_var + eps)
    y = (y - run_mean[None, :, None, None]) * inv[None, :, None, None]
    y = y * gamma[None, :, None, None] + beta[None, :, None, None]
    return jnp.maximum(y, 0.0)


if __name__ == "__main__":
    key = jax.random.PRNGKey(0)
    N, Cin, Cout, H, W = 2, 4, 8, 16, 16

    k = jax.random.split(key, 6)
    x = jax.random.normal(k[0], (N, Cin, H, W), jnp.float32)
    conv1_w = jax.random.normal(k[1], (Cout, Cin, 1, 1), jnp.float32) * 0.2
    conv2_w = jax.random.normal(k[2], (Cout, 1, 3, 3), jnp.float32) * 0.2
    gamma = 1.0 + 0.1 * jax.random.normal(k[3], (Cout,), jnp.float32)
    beta = 0.1 * jax.random.normal(k[4], (Cout,), jnp.float32)
    run_mean = 0.1 * jax.random.normal(k[5], (Cout,), jnp.float32)
    run_var = jnp.abs(0.5 + 0.1 * jnp.arange(Cout, dtype=jnp.float32))

    ref = _reference(x, conv1_w, conv2_w, gamma, beta, run_mean, run_var)

    # Path 1: full-image tile (default for this shape).
    out_full = jax.block_until_ready(
        light_conv3x3(x, conv1_w, conv2_w, gamma, beta, run_mean, run_var))
    # Path 2: forced row-tiling (exercises the halo path, TH=8 -> nH=2).
    out_tiled = jax.block_until_ready(
        light_conv3x3(x, conv1_w, conv2_w, gamma, beta, run_mean, run_var,
                      max_tile_rows=8))

    # bf16 MXU operands (f32 accumulation) -> slightly looser tolerance.
    np.testing.assert_allclose(np.asarray(out_full), np.asarray(ref),
                               rtol=2e-2, atol=2e-2)
    np.testing.assert_allclose(np.asarray(out_tiled), np.asarray(ref),
                               rtol=2e-2, atol=2e-2)
    print("KERNEL_OK")
</pallas_src>

<mosaic_0001>
module attributes {stable_mosaic.version = 11 : i64} {
  func.func @_lightconv_full_kernel(%arg0: i32, %arg1: i32, %arg2: memref<1x4x256xf32, #tpu.memory_space<vmem>>, %arg3: memref<8x4xbf16, #tpu.memory_space<vmem>>, %arg4: memref<8x9xf32, #tpu.memory_space<vmem>>, %arg5: memref<8x1xf32, #tpu.memory_space<vmem>>, %arg6: memref<2x256xf32, #tpu.memory_space<vmem>>, %arg7: memref<1x8x256xf32, #tpu.memory_space<vmem>>) attributes {dimension_semantics = [#tpu.dimension_semantics<parallel>, #tpu.dimension_semantics<parallel>], iteration_bounds = array<i64: 2, 1>, scalar_prefetch = 0 : i64, scratch_operands = 0 : i64, tpu.core_type = #tpu.core_type<tc>, window_params = [{transform_indices = @transform_0, window_bounds = array<i64: 1, 4, 256>}, {pipeline_mode = #tpu.pipeline_mode<synchronous>, transform_indices = @transform_1, window_bounds = array<i64: 8, 4>}, {pipeline_mode = #tpu.pipeline_mode<synchronous>, transform_indices = @transform_2, window_bounds = array<i64: 8, 9>}, {pipeline_mode = #tpu.pipeline_mode<synchronous>, transform_indices = @transform_3, window_bounds = array<i64: 8, 1>}, {pipeline_mode = #tpu.pipeline_mode<synchronous>, transform_indices = @transform_4, window_bounds = array<i64: 2, 256>}, {transform_indices = @transform_5, window_bounds = array<i64: 1, 8, 256>}]} {
    %c0 = arith.constant 0 : index
    %c0_0 = arith.constant 0 : index
    %c0_1 = arith.constant 0 : index
    %0 = vector.load %arg2[%c0, %c0_0, %c0_1] : memref<1x4x256xf32, #tpu.memory_space<vmem>>, vector<1x4x256xf32>
    %1 = vector.shape_cast %0 : vector<1x4x256xf32> to vector<4x256xf32>
    %cst = arith.constant 0.000000e+00 : f32
    %2 = vector.broadcast %cst : f32 to vector<4x16xf32>
    %cst_2 = arith.constant 0.000000e+00 : f32
    %3 = vector.broadcast %cst_2 : f32 to vector<4x1xf32>
    %4 = tpu.concatenate %3, %2, %1, %2, %3 in 1 : vector<4x1xf32>, vector<4x16xf32>, vector<4x256xf32>, vector<4x16xf32>, vector<4x1xf32> -> vector<4x290xf32>
    %c0_3 = arith.constant 0 : index
    %c0_4 = arith.constant 0 : index
    %5 = vector.load %arg3[%c0_3, %c0_4] : memref<8x4xbf16, #tpu.memory_space<vmem>>, vector<8x4xbf16>
    %6 = arith.truncf %4 : vector<4x290xf32> to vector<4x290xbf16>
    %cst_5 = arith.constant dense<0.000000e+00> : vector<8x290xf32>
    %7 = tpu.matmul %5, %6, %cst_5 {dimension_numbers = #tpu.dot_dimension_numbers<[1], [0], [0], [1], [0, 0, 1, 1], [], []>} : vector<8x4xbf16>, vector<4x290xbf16>, vector<8x290xf32> -> vector<8x290xf32>
    %c0_6 = arith.constant 0 : index
    %c0_7 = arith.constant 0 : index
    %8 = vector.load %arg4[%c0_6, %c0_7] : memref<8x9xf32, #tpu.memory_space<vmem>>, vector<8x9xf32>
    %9 = vector.extract_strided_slice %7 {offsets = [0, 0], sizes = [8, 258], strides = [1, 1]} : vector<8x290xf32> to vector<8x258xf32>
    %10 = vector.extract_strided_slice %7 {offsets = [0, 16], sizes = [8, 258], strides = [1, 1]} : vector<8x290xf32> to vector<8x258xf32>
    %11 = vector.extract_strided_slice %7 {offsets = [0, 32], sizes = [8, 258], strides = [1, 1]} : vector<8x290xf32> to vector<8x258xf32>
    %c0_8 = arith.constant 0 : index
    %c0_9 = arith.constant 0 : index
    %12 = vector.load %arg6[%c0_8, %c0_9] : memref<2x256xf32, #tpu.memory_space<vmem>>, vector<2x256xf32>
    %13 = vector.extract_strided_slice %8 {offsets = [0, 1], sizes = [8, 1], strides = [1, 1]} : vector<8x9xf32> to vector<8x1xf32>
    %14 = vector.shape_cast %13 : vector<8x1xf32> to vector<8xf32>
    %15 = vector.shape_cast %14 : vector<8xf32> to vector<8x1xf32>
    %16 = vector.broadcast %15 : vector<8x1xf32> to vector<8x258xf32>
    %17 = arith.mulf %9, %16 : vector<8x258xf32>
    %18 = vector.extract_strided_slice %8 {offsets = [0, 4], sizes = [8, 1], strides = [1, 1]} : vector<8x9xf32> to vector<8x1xf32>
    %19 = vector.shape_cast %18 : vector<8x1xf32> to vector<8xf32>
    %20 = vector.shape_cast %19 : vector<8xf32> to vector<8x1xf32>
    %21 = vector.broadcast %20 : vector<8x1xf32> to vector<8x258xf32>
    %22 = arith.mulf %10, %21 : vector<8x258xf32>
    %23 = arith.addf %17, %22 : vector<8x258xf32>
    %24 = vector.extract_strided_slice %8 {offsets = [0, 7], sizes = [8, 1], strides = [1, 1]} : vector<8x9xf32> to vector<8x1xf32>
    %25 = vector.shape_cast %24 : vector<8x1xf32> to vector<8xf32>
    %26 = vector.shape_cast %25 : vector<8xf32> to vector<8x1xf32>
    %27 = vector.broadcast %26 : vector<8x1xf32> to vector<8x258xf32>
    %28 = arith.mulf %11, %27 : vector<8x258xf32>
    %29 = arith.addf %23, %28 : vector<8x258xf32>
    %30 = vector.extract_strided_slice %29 {offsets = [0, 1], sizes = [8, 256], strides = [1, 1]} : vector<8x258xf32> to vector<8x256xf32>
    %31 = vector.extract_strided_slice %12 {offsets = [0, 0], sizes = [1, 256], strides = [1, 1]} : vector<2x256xf32> to vector<1x256xf32>
    %32 = vector.extract_strided_slice %8 {offsets = [0, 0], sizes = [8, 1], strides = [1, 1]} : vector<8x9xf32> to vector<8x1xf32>
    %33 = vector.shape_cast %32 : vector<8x1xf32> to vector<8xf32>
    %34 = vector.shape_cast %33 : vector<8xf32> to vector<8x1xf32>
    %35 = vector.broadcast %34 : vector<8x1xf32> to vector<8x258xf32>
    %36 = arith.mulf %9, %35 : vector<8x258xf32>
    %37 = vector.extract_strided_slice %8 {offsets = [0, 3], sizes = [8, 1], strides = [1, 1]} : vector<8x9xf32> to vector<8x1xf32>
    %38 = vector.shape_cast %37 : vector<8x1xf32> to vector<8xf32>
    %39 = vector.shape_cast %38 : vector<8xf32> to vector<8x1xf32>
    %40 = vector.broadcast %39 : vector<8x1xf32> to vector<8x258xf32>
    %41 = arith.mulf %10, %40 : vector<8x258xf32>
    %42 = arith.addf %36, %41 : vector<8x258xf32>
    %43 = vector.extract_strided_slice %8 {offsets = [0, 6], sizes = [8, 1], strides = [1, 1]} : vector<8x9xf32> to vector<8x1xf32>
    %44 = vector.shape_cast %43 : vector<8x1xf32> to vector<8xf32>
    %45 = vector.shape_cast %44 : vector<8xf32> to vector<8x1xf32>
    %46 = vector.broadcast %45 : vector<8x1xf32> to vector<8x258xf32>
    %47 = arith.mulf %11, %46 : vector<8x258xf32>
    %48 = arith.addf %42, %47 : vector<8x258xf32>
    %49 = vector.extract_strided_slice %48 {offsets = [0, 0], sizes = [8, 256], strides = [1, 1]} : vector<8x258xf32> to vector<8x256xf32>
    %50 = vector.broadcast %31 : vector<1x256xf32> to vector<8x256xf32>
    %51 = arith.mulf %50, %49 : vector<8x256xf32>
    %52 = arith.addf %30, %51 : vector<8x256xf32>
    %53 = vector.extract_strided_slice %12 {offsets = [1, 0], sizes = [1, 256], strides = [1, 1]} : vector<2x256xf32> to vector<1x256xf32>
    %54 = vector.extract_strided_slice %8 {offsets = [0, 2], sizes = [8, 1], strides = [1, 1]} : vector<8x9xf32> to vector<8x1xf32>
    %55 = vector.shape_cast %54 : vector<8x1xf32> to vector<8xf32>
    %56 = vector.shape_cast %55 : vector<8xf32> to vector<8x1xf32>
    %57 = vector.broadcast %56 : vector<8x1xf32> to vector<8x258xf32>
    %58 = arith.mulf %9, %57 : vector<8x258xf32>
    %59 = vector.extract_strided_slice %8 {offsets = [0, 5], sizes = [8, 1], strides = [1, 1]} : vector<8x9xf32> to vector<8x1xf32>
    %60 = vector.shape_cast %59 : vector<8x1xf32> to vector<8xf32>
    %61 = vector.shape_cast %60 : vector<8xf32> to vector<8x1xf32>
    %62 = vector.broadcast %61 : vector<8x1xf32> to vector<8x258xf32>
    %63 = arith.mulf %10, %62 : vector<8x258xf32>
    %64 = arith.addf %58, %63 : vector<8x258xf32>
    %65 = vector.extract_strided_slice %8 {offsets = [0, 8], sizes = [8, 1], strides = [1, 1]} : vector<8x9xf32> to vector<8x1xf32>
    %66 = vector.shape_cast %65 : vector<8x1xf32> to vector<8xf32>
    %67 = vector.shape_cast %66 : vector<8xf32> to vector<8x1xf32>
    %68 = vector.broadcast %67 : vector<8x1xf32> to vector<8x258xf32>
    %69 = arith.mulf %11, %68 : vector<8x258xf32>
    %70 = arith.addf %64, %69 : vector<8x258xf32>
    %71 = vector.extract_strided_slice %70 {offsets = [0, 2], sizes = [8, 256], strides = [1, 1]} : vector<8x258xf32> to vector<8x256xf32>
    %72 = vector.broadcast %53 : vector<1x256xf32> to vector<8x256xf32>
    %73 = arith.mulf %72, %71 : vector<8x256xf32>
    %74 = arith.addf %52, %73 : vector<8x256xf32>
    %c0_10 = arith.constant 0 : index
    %c0_11 = arith.constant 0 : index
    %75 = vector.load %arg5[%c0_10, %c0_11] : memref<8x1xf32, #tpu.memory_space<vmem>>, vector<8x1xf32>
    %76 = vector.broadcast %75 : vector<8x1xf32> to vector<8x256xf32>
    %77 = arith.addf %74, %76 : vector<8x256xf32>
    %cst_12 = arith.constant 0.000000e+00 : f32
    %78 = vector.broadcast %cst_12 : f32 to vector<8x256xf32>
    %79 = arith.maximumf %77, %78 : vector<8x256xf32>
    %c0_13 = arith.constant 0 : index
    %c0_14 = arith.constant 0 : index
    %c0_15 = arith.constant 0 : index
    %80 = vector.load %arg7[%c0_13, %c0_14, %c0_15] : memref<1x8x256xf32, #tpu.memory_space<vmem>>, vector<1x8x256xf32>
    %81 = vector.shape_cast %80 : vector<1x8x256xf32> to vector<8x256xf32>
    %82 = vector.shape_cast %79 : vector<8x256xf32> to vector<1x8x256xf32>
    tpu.vector_store %arg7[%c0_13, %c0_14, %c0_15], %82 {strides = array<i32>} : memref<1x8x256xf32, #tpu.memory_space<vmem>>, vector<1x8x256xf32>,
    return
  }
  func.func @transform_0(%arg0: i32, %arg1: i32) -> (i32, i32, i32) {
    %c0_i32 = arith.constant 0 : i32
    %c0_i32_0 = arith.constant 0 : i32
    return %arg0, %c0_i32, %arg1 : i32, i32, i32
  }
  func.func @transform_1(%arg0: i32, %arg1: i32) -> (i32, i32) {
    %c0_i32 = arith.constant 0 : i32
    %c0_i32_0 = arith.constant 0 : i32
    %c0_i32_1 = arith.constant 0 : i32
    return %c0_i32, %c0_i32_0 : i32, i32
  }
  func.func @transform_2(%arg0: i32, %arg1: i32) -> (i32, i32) {
    %c0_i32 = arith.constant 0 : i32
    %c0_i32_0 = arith.constant 0 : i32
    %c0_i32_1 = arith.constant 0 : i32
    return %c0_i32, %c0_i32_0 : i32, i32
  }
  func.func @transform_3(%arg0: i32, %arg1: i32) -> (i32, i32) {
    %c0_i32 = arith.constant 0 : i32
    %c0_i32_0 = arith.constant 0 : i32
    %c0_i32_1 = arith.constant 0 : i32
    return %c0_i32, %c0_i32_0 : i32, i32
  }
  func.func @transform_4(%arg0: i32, %arg1: i32) -> (i32, i32) {
    %c0_i32 = arith.constant 0 : i32
    %c0_i32_0 = arith.constant 0 : i32
    %c0_i32_1 = arith.constant 0 : i32
    return %c0_i32, %c0_i32_0 : i32, i32
  }
  func.func @transform_5(%arg0: i32, %arg1: i32) -> (i32, i32, i32) {
    %c0_i32 = arith.constant 0 : i32
    %c0_i32_0 = arith.constant 0 : i32
    return %arg0, %c0_i32, %arg1 : i32, i32, i32
  }
}

</mosaic_0001>

<llo_original>
// kernel: tpu_custom_call.1
$region0: #{tpu_custom_call.1}
  #allocation0 [shape = 'u32[]', space=smem, size = 0x4, offset = 0x4, fixed_abs, tag = 'smem constant byte address 0x4 - core index']
  #allocation1 [shape = 'u32[72,128]{1,0:T(1,128)}', space=vmem, size = 0x9000, scoped, tag = 'internal scratch']
  %s0 = inlined_call_operand.hbm [shape: f32[2,4,256], index: 0, kind: input, shape index: {}]
  %s1 = inlined_call_operand.vmem [shape: bf16[8,4], index: 1, kind: input, shape index: {}]
  %s2 = inlined_call_operand.vmem [shape: f32[8,9], index: 2, kind: input, shape index: {}]
  %s3 = inlined_call_operand.vmem [shape: f32[8,1], index: 3, kind: input, shape index: {}]
  %s4 = inlined_call_operand.vmem [shape: f32[2,256], index: 4, kind: input, shape index: {}]
  %s5 = inlined_call_operand.hbm [shape: f32[2,8,256], index: 5, kind: output, shape index: {}]
  %s6 = sld [smem:[#allocation0]]
  $region57: #{tpu_custom_call.1} parent=0
    _
  %s8 = ssub.s32 1, %s6
  %s9 = scalar_select 0, %s8, %s6
  $region1: #{tpu_custom_call.1} parent=0
    #allocation2 [shape = 'u8[8192]{0}', space=vmem, size = 0x2000, scoped, tag = 'input window, operand 0']
    #allocation3 [shape = 's32[2]{0}', space=sflag, size = 0x8, scoped, tag = 'scoped memory for tpu_custom_call.1']
    #allocation4 [shape = 's32[2]{0}', space=sflag, size = 0x8, scoped, tag = 'scoped memory for tpu_custom_call.1']
    #allocation5 [shape = 'u8[16384]{0}', space=vmem, size = 0x4000, scoped, tag = 'output window, operand 0']
    %10 = vsyncpa [#allocation3], 0
    %s11 = scalar_lea.sflag [#allocation3], 1
    %12 = vsyncpa %s11, 0
    %13 = vsyncpa [#allocation4], 0
    %s14 = scalar_lea.sflag [#allocation4], 1
    %15 = vsyncpa %s14, 0
    loop: start=0, step=1, limit=4
    $region2: #{tpu_custom_call.1} parent=1 // loop_pre_header
      _
    $region3: #{tpu_custom_call.1} parent=1 // loop_header
      %s17 = sphi 0, %s21
      %p18 = scmp.ge.s32.totalorder %s17, 4
      %s24 = sphi 0, %s36
      %s25 = sphi 0, %s32
      %s26 = sphi 0, %s24
      %s27 = sphi 0, %s25
      %s28 = sphi 0, %s26
      %s29 = sphi 0, %s27
      %s41 = sphi 0, %s43
      %s44 = sphi 0, %s41
      %s45 = sphi 0, %s44
      %s61 = sphi 0, %s45
      %s65 = sphi 0, %s65
      %s67 = sphi 0, %s65
      %s68 = sphi 0, %s67
      %s82 = sphi 0, %s68
      %s86 = sphi 0, %s86
      %s88 = sphi 0, %s86
      %s89 = sphi 0, %s88
      %s103 = sphi 0, %s89
      %s107 = sphi 0, %s107
      %s109 = sphi 0, %s107
      %s110 = sphi 0, %s109
      %s124 = sphi 0, %s110
      %s128 = sphi 0, %s128
      %s130 = sphi 0, %s128
      %s131 = sphi 0, %s130
      %s145 = sphi 0, %s131
      %s153 = sphi 0, %s155
      %s156 = sphi 0, %s153
      %s157 = sphi 0, %s156
      %s173 = sphi 0, %s157
    $region4: #{tpu_custom_call.1} parent=1 // loop_header_branch
      %20 = sbr.rel (%p18) target = $region8
    $region5: #{tpu_custom_call.1} parent=1 // loop_body
      %s22 = ssub.s32 %s17, 1
      %s23 = ssub.s32 %s17, 2
      %s30 = sadd.s32 1, %s25
      %p31 = scmp.ge.s32.totalorder %s30, 1
      %s32 = scalar_select %p31, 0, %s30
      %s33 = sadd.s32 1, %s24
      %s34 = scalar_select %p31, %s33, %s24
      %p35 = scmp.ge.s32.totalorder %s34, 2
      %s36 = scalar_select %p35, 0, %s34
      %s37 = ssub.s32 %s24, %s36
      %s38 = ssub.s32 %s25, %s32
      %s39 = sor.u32 %s37, %s38
      %p40 = scmp.eq.s32.totalorder %s39, 0
      %s42 = sadd.s32 %s41, 1
      %s43 = scalar_select %p40, %s41, %s42
      %p46 = pneg %p40
      %p47 = scmp.eq.s32.totalorder %s17, 1
      %p48 = por %p46, %p47
      %p49 = scmp.ne.s32.totalorder %s41, %s44
      %p50 = scmp.eq.s32.totalorder %s17, 0
      %p51 = por %p49, %p50
      %p52 = scmp.ne.s32.totalorder %s41, %s44
      %p53 = scmp.eq.s32.totalorder %s22, 1
      %p54 = por %p52, %p53
      %p55 = scmp.ne.s32.totalorder %s44, %s45
      %p56 = scmp.eq.s32.totalorder %s22, 0
      %p57 = por %p55, %p56
      %p58 = scmp.ne.s32.totalorder %s44, %s45
      %p59 = scmp.eq.s32.totalorder %s23, 1
      %p60 = por %p58, %p59
      %p62 = scmp.ne.s32.totalorder %s45, %s61
      %p63 = scmp.eq.s32.totalorder %s23, 0
      %p64 = por %p62, %p63
      %s66 = sadd.s32 %s65, 1
      %p69 = scmp.eq.s32.totalorder %s17, 1
      %p70 = scmp.ne.s32.totalorder %s65, %s67
      %p71 = scmp.eq.s32.totalorder %s17, 0
      %p72 = por %p70, %p71
      %p73 = scmp.ne.s32.totalorder %s65, %s67
      %p74 = scmp.eq.s32.totalorder %s22, 1
      %p75 = por %p73, %p74
      %p76 = scmp.ne.s32.totalorder %s67, %s68
      %p77 = scmp.eq.s32.totalorder %s22, 0
      %p78 = por %p76, %p77
      %p79 = scmp.ne.s32.totalorder %s67, %s68
      %p80 = scmp.eq.s32.totalorder %s23, 1
      %p81 = por %p79, %p80
      %p83 = scmp.ne.s32.totalorder %s68, %s82
      %p84 = scmp.eq.s32.totalorder %s23, 0
      %p85 = por %p83, %p84
      %s87 = sadd.s32 %s86, 1
      %p90 = scmp.eq.s32.totalorder %s17, 1
      %p91 = scmp.ne.s32.totalorder %s86, %s88
      %p92 = scmp.eq.s32.totalorder %s17, 0
      %p93 = por %p91, %p92
      %p94 = scmp.ne.s32.totalorder %s86, %s88
      %p95 = scmp.eq.s32.totalorder %s22, 1
      %p96 = por %p94, %p95
      %p97 = scmp.ne.s32.totalorder %s88, %s89
      %p98 = scmp.eq.s32.totalorder %s22, 0
      %p99 = por %p97, %p98
      %p100 = scmp.ne.s32.totalorder %s88, %s89
      %p101 = scmp.eq.s32.totalorder %s23, 1
      %p102 = por %p100, %p101
      %p104 = scmp.ne.s32.totalorder %s89, %s103
      %p105 = scmp.eq.s32.totalorder %s23, 0
      %p106 = por %p104, %p105
      %s108 = sadd.s32 %s107, 1
      %p111 = scmp.eq.s32.totalorder %s17, 1
      %p112 = scmp.ne.s32.totalorder %s107, %s109
      %p113 = scmp.eq.s32.totalorder %s17, 0
      %p114 = por %p112, %p113
      %p115 = scmp.ne.s32.totalorder %s107, %s109
      %p116 = scmp.eq.s32.totalorder %s22, 1
      %p117 = por %p115, %p116
      %p118 = scmp.ne.s32.totalorder %s109, %s110
      %p119 = scmp.eq.s32.totalorder %s22, 0
      %p120 = por %p118, %p119
      %p121 = scmp.ne.s32.totalorder %s109, %s110
      %p122 = scmp.eq.s32.totalorder %s23, 1
      %p123 = por %p121, %p122
      %p125 = scmp.ne.s32.totalorder %s110, %s124
      %p126 = scmp.eq.s32.totalorder %s23, 0
      %p127 = por %p125, %p126
      %s129 = sadd.s32 %s128, 1
      %p132 = scmp.eq.s32.totalorder %s17, 1
      %p133 = scmp.ne.s32.totalorder %s128, %s130
      %p134 = scmp.eq.s32.totalorder %s17, 0
      %p135 = por %p133, %p134
      %p136 = scmp.ne.s32.totalorder %s128, %s130
      %p137 = scmp.eq.s32.totalorder %s22, 1
      %p138 = por %p136, %p137
      %p139 = scmp.ne.s32.totalorder %s130, %s131
      %p140 = scmp.eq.s32.totalorder %s22, 0
      %p141 = por %p139, %p140
      %p142 = scmp.ne.s32.totalorder %s130, %s131
      %p143 = scmp.eq.s32.totalorder %s23, 1
      %p144 = por %p142, %p143
      %p146 = scmp.ne.s32.totalorder %s131, %s145
      %p147 = scmp.eq.s32.totalorder %s23, 0
      %p148 = por %p146, %p147
      %s149 = ssub.s32 %s24, %s36
      %s150 = ssub.s32 %s25, %s32
      %s151 = sor.u32 %s149, %s150
      %p152 = scmp.eq.s32.totalorder %s151, 0
      %s154 = sadd.s32 %s153, 1
      %s155 = scalar_select %p152, %s153, %s154
      %p158 = pneg %p152
      %p159 = scmp.eq.s32.totalorder %s17, 1
      %p160 = por %p158, %p159
      %p161 = scmp.ne.s32.totalorder %s153, %s156
      %p162 = scmp.eq.s32.totalorder %s17, 0
      %p163 = por %p161, %p162
      %p164 = scmp.ne.s32.totalorder %s153, %s156
      %p165 = scmp.eq.s32.totalorder %s22, 1
      %p166 = por %p164, %p165
      %p167 = scmp.ne.s32.totalorder %s156, %s157
      %p168 = scmp.eq.s32.totalorder %s22, 0
      %p169 = por %p167, %p168
      %p170 = scmp.ne.s32.totalorder %s156, %s157
      %p171 = scmp.eq.s32.totalorder %s23, 1
      %p172 = por %p170, %p171
      %p174 = scmp.ne.s32.totalorder %s157, %s173
      %p175 = scmp.eq.s32.totalorder %s23, 0
      %p176 = por %p174, %p175
      %p177 = scmp.le.s32.totalorder 1, %s17
      %p178 = scmp.lt.s32.totalorder %s17, 3
      %p179 = pnand %p177, %p178
      %p180 = pneg %p179
      // Predicated region
      $region9: #{tpu_custom_call.1} parent=5 // pred_check
        _
      $region10: #{tpu_custom_call.1} parent=5 // pred_check_branch
        %182 = sbr.rel (%p179) target = $region12
      $region11: #{tpu_custom_call.1} parent=5 // pred_region
        %s183 = ssub.s32 %s17, 1
        // Predicated region
        $region13: #{tpu_custom_call.1} parent=11 // pred_check
          %p184 = pneg %p78
        $region14: #{tpu_custom_call.1} parent=11 // pred_check_branch
          %186 = sbr.rel (%p184) target = $region16
        $region15: #{tpu_custom_call.1} parent=11 // pred_region
          _
        $region16: #{tpu_custom_call.1} parent=11 // pred_fallthru
          _
        // Predicated region
        $region17: #{tpu_custom_call.1} parent=11 // pred_check
          %p187 = pneg %p99
        $region18: #{tpu_custom_call.1} parent=11 // pred_check_branch
          %189 = sbr.rel (%p187) target = $region20
        $region19: #{tpu_custom_call.1} parent=11 // pred_region
          _
        $region20: #{tpu_custom_call.1} parent=11 // pred_fallthru
          _
        // Predicated region
        $region21: #{tpu_custom_call.1} parent=11 // pred_check
          %p190 = pneg %p120
        $region22: #{tpu_custom_call.1} parent=11 // pred_check_branch
          %192 = sbr.rel (%p190) target = $region24
        $region23: #{tpu_custom_call.1} parent=11 // pred_region
          _
        $region24: #{tpu_custom_call.1} parent=11 // pred_fallthru
          _
        // Predicated region
        $region25: #{tpu_custom_call.1} parent=11 // pred_check
          %p193 = pneg %p141
        $region26: #{tpu_custom_call.1} parent=11 // pred_check_branch
          %195 = sbr.rel (%p193) target = $region28
        $region27: #{tpu_custom_call.1} parent=11 // pred_region
          _
        $region28: #{tpu_custom_call.1} parent=11 // pred_fallthru
          _
      $region12: #{tpu_custom_call.1} parent=5 // pred_fallthru
        _
      %p196 = scmp.lt.s32.totalorder %s17, 2
      // Predicated region
      $region29: #{tpu_custom_call.1} parent=5 // pred_check
        %p197 = pneg %p196
      $region30: #{tpu_custom_call.1} parent=5 // pred_check_branch
        %199 = sbr.rel (%p197) target = $region32
      $region31: #{tpu_custom_call.1} parent=5 // pred_region
        // Predicated region
        $region33: #{tpu_custom_call.1} parent=31 // pred_check
          %p200 = pneg %p51
        $region34: #{tpu_custom_call.1} parent=31 // pred_check_branch
          %202 = sbr.rel (%p200) target = $region36
        $region35: #{tpu_custom_call.1} parent=31 // pred_region
          %s203 = sand.u32 %s41, 1
          %s204 = scalar_lea.sflag [#allocation3], %s203
          %s205 = sand.u32 %s41, 1
          %s206 = smul.addr %s205, 8
          %s207 = scalar_lea.vmem [#allocation2], %s206
          %s208 = smul.u32 2, %s25
          %210 = vsyncadd %s204, 0
          %s211 = smul.addr %s24, 2
          %s212 = sadd.s32 %s208, %s211
          %s213 = smul.addr %s212, 4
          %s214 = scalar_lea.hbm %s0, %s213
          %s216 = sshll.u32 %s214, 4
          %s217 = int_to_ptr.hbm [resolvable:$true] %s216
          %s218 = sshll.u32 %s207, 4
          %s219 = int_to_ptr.vmem [resolvable:$true] %s218
          %221 = dma.hbm_to_vmem [thread:$0]  %s217, 128, %s219, %s204
        $region36: #{tpu_custom_call.1} parent=31 // pred_fallthru
          _
      $region32: #{tpu_custom_call.1} parent=5 // pred_fallthru
        _
      %p222 = scmp.le.s32.totalorder 1, %s17
      %p223 = scmp.lt.s32.totalorder %s17, 3
      %p224 = pnand %p222, %p223
      %p225 = pneg %p224
      // Predicated region
      $region37: #{tpu_custom_call.1} parent=5 // pred_check
        _
      $region38: #{tpu_custom_call.1} parent=5 // pred_check_branch
        %227 = sbr.rel (%p224) target = $region40
      $region39: #{tpu_custom_call.1} parent=5 // pred_region
        %s228 = ssub.s32 %s17, 1
        %s229 = sand.u32 %s44, 1
        %s230 = scalar_lea.sflag [#allocation3], %s229
        %s231 = sand.u32 %s44, 1
        %s232 = smul.addr %s231, 8
        %s233 = scalar_lea.vmem [#allocation2], %s232
        // Predicated region
        $region41: #{tpu_custom_call.1} parent=39 // pred_check
          %p234 = pneg %p57
        $region42: #{tpu_custom_call.1} parent=39 // pred_check_branch
          %236 = sbr.rel (%p234) target = $region44
        $region43: #{tpu_custom_call.1} parent=39 // pred_region
          %238 = dma.done %s230, 128
        $region44: #{tpu_custom_call.1} parent=39 // pred_fallthru
          _
        %s239 = sand.u32 %s44, 1
        %s240 = scalar_lea.sflag [#allocation3], %s239
        %s241 = sand.u32 %s44, 1
        %s242 = smul.addr %s241, 8
        %s243 = scalar_lea.vmem [#allocation2], %s242
        %p244 = pneg %p57
        %p245 = pneg %p54
        %p246 = pneg %p78
        %p247 = pneg %p75
        %p248 = pneg %p99
        %p249 = pneg %p96
        %p250 = pneg %p120
        %p251 = pneg %p117
        %p252 = pneg %p141
        %p253 = pneg %p138
        %p254 = pneg %p169
        %p255 = pneg %p166
        %s256 = sand.u32 %s156, 1
        %s257 = scalar_lea.sflag [#allocation4], %s256
        %s258 = sand.u32 %s156, 1
        %s259 = smul.addr %s258, 16
        %s260 = scalar_lea.vmem [#allocation5], %s259
        %s261 = smul.u32 2, %s27
        %s262 = smul.u32 2, %s27
        %v264 = vld [vmem:[%s233] sm:$0xff]
        %266 = vst [vmem:[#allocation1] ss:$2 sm:$0xff] %v264
        %v267 = vld.sshfl [vmem:[#allocation1] sm:$0xff pattern:$0x75316420]
        %v268 = vld.sshfl [vmem:[#allocation1 + $0x8] sm:$0xff pattern:$0x75316420]
        %269 = vrot.lane.b32.xlu0 %v267, 17
        %v270 = vpop.permute.xlu0 %269
        %271 = vrot.lane.b32.xlu0 %v268, 17
        %v272 = vpop.permute.xlu0 %271
        %vm273 = vcmask 138240
        %v274 = vsel %vm273, %v270, %v272
        %v278 = vsel %vm273, 0.0, %v270
        %v279 = vsel %vm273, %v272, 0.0
        %vm280 = vcmask 269312
        %v281 = vsel %vm280, %v279, 0.0
        %v282 = vld [vmem:[%s1] sm:$0xf]
        %v283 = vpack.c.bf16 %v278, %v278
        %v284 = vpack.c.bf16 %v274, %v274
        %v285 = vpack.c.bf16 %v281, %v281
        %vm286 = vcmask 31744
        %v288 = vsel %vm286, %v282, 0
        %vm290 = vcmask 1041408
        %v292 = vsel %vm290, %v283, 0
        %v295 = vsel %vm290, %v284, 0
        %v298 = vsel %vm290, %v285, 0
        %300 = vmatpush.bf16.msra.mxu0 0
        %301 = vmatpush.bf16.msra.mxu0 0
        %302 = vmatpush.bf16.msra.mxu0 0
        %303 = vmatpush.bf16.msra.mxu0 0
        %304 = vmatpush.bf16.msra.mxu0 0
        %305 = vmatpush.bf16.msra.mxu0 0
        %306 = vmatpush.bf16.msra.mxu0 0
        %307 = vmatpush.bf16.msra.mxu0 %v292
        %308 = vmatmul.bf16.gmra.mxu0 %v288
        %v309 = vpop.f32.mrf.mxu0
        %v310 = vadd.f32 0.0, %v309
        %v311 = vpop.f32.mrf.mxu0
        %312 = vdwg.mxu0
        %313 = vmatpush.bf16.msra.mxu0 0
        %314 = vmatpush.bf16.msra.mxu0 0
        %315 = vmatpush.bf16.msra.mxu0 0
        %316 = vmatpush.bf16.msra.mxu0 0
        %317 = vmatpush.bf16.msra.mxu0 0
        %318 = vmatpush.bf16.msra.mxu0 0
        %319 = vmatpush.bf16.msra.mxu0 0
        %320 = vmatpush.bf16.msra.mxu0 %v295
        %321 = vmatmul.bf16.gmra.mxu0 %v288
        %v322 = vpop.f32.mrf.mxu0
        %v323 = vadd.f32 0.0, %v322
        %v324 = vpop.f32.mrf.mxu0
        %325 = vdwg.mxu0
        %326 = vmatpush.bf16.msra.mxu0 0
        %327 = vmatpush.bf16.msra.mxu0 0
        %328 = vmatpush.bf16.msra.mxu0 0
        %329 = vmatpush.bf16.msra.mxu0 0
        %330 = vmatpush.bf16.msra.mxu0 0
        %331 = vmatpush.bf16.msra.mxu0 0
        %332 = vmatpush.bf16.msra.mxu0 0
        %333 = vmatpush.bf16.msra.mxu0 %v298
        %334 = vmatmul.bf16.gmra.mxu0 %v288
        %v335 = vpop.f32.mrf.mxu0
        %v336 = vadd.f32 0.0, %v335
        %v337 = vpop.f32.mrf.mxu0
        %338 = vdwg.mxu0
        %v339 = vld [vmem:[%s2] sm:$0xff]
        %v340 = vld [vmem:[%s4] sm:$0xf]
        %342 = vset.pattern.permute.xlu0 1
        %343 = vperm.xlu0 %342, %v339
        %v344 = vpop.permute.xlu0 %343
        %v346 = vmul.f32 %v310, %v344
        %v347 = vmul.f32 %v323, %v344
        %v348 = vmul.f32 %v336, %v344
        %349 = vset.pattern.permute.xlu0 4
        %350 = vperm.xlu0 %349, %v339
        %v351 = vpop.permute.xlu0 %350
        %v353 = vmul.f32 %v310, %v351
        %v354 = vmul.f32 %v323, %v351
        %v355 = vmul.f32 %v336, %v351
        %359 = vrot.lane.b32.xlu0 %v353, 112
        %v360 = vpop.permute.xlu0 %359
        %361 = vrot.lane.b32.xlu0 %v354, 112
        %v362 = vpop.permute.xlu0 %361
        %363 = vrot.lane.b32.xlu0 %v355, 112
        %v364 = vpop.permute.xlu0 %363
        %vm365 = vcmask 916480
        %v366 = vsel %vm365, %v360, %v362
        %v367 = vsel %vm365, %v362, %v364
        %v371 = vadd.f32 %v346, %v366
        %v372 = vadd.f32 %v347, %v367
        %v373 = vadd.f32 %v348, %v364
        %374 = vset.pattern.permute.xlu0 7
        %375 = vperm.xlu0 %374, %v339
        %v376 = vpop.permute.xlu0 %375
        %v378 = vmul.f32 %v310, %v376
        %v379 = vmul.f32 %v323, %v376
        %v380 = vmul.f32 %v336, %v376
        %384 = vrot.lane.b32.xlu0 %v378, 96
        %v385 = vpop.permute.xlu0 %384
        %386 = vrot.lane.b32.xlu0 %v379, 96
        %v387 = vpop.permute.xlu0 %386
        %388 = vrot.lane.b32.xlu0 %v380, 96
        %v389 = vpop.permute.xlu0 %388
        %vm390 = vcmask 785408
        %v391 = vsel %vm390, %v385, %v387
        %v392 = vsel %vm390, %v387, %v389
        %v396 = vadd.f32 %v371, %v391
        %v397 = vadd.f32 %v372, %v392
        %v398 = vadd.f32 %v373, %v389
        %399 = vset.pattern.permute.xlu0 0
        %400 = vperm.xlu0 %399, %v339
        %v401 = vpop.permute.xlu0 %400
        %v403 = vmul.f32 %v310, %v401
        %v404 = vmul.f32 %v323, %v401
        %405 = vset.pattern.permute.xlu0 3
        %406 = vperm.xlu0 %405, %v339
        %v407 = vpop.permute.xlu0 %406
        %v409 = vmul.f32 %v310, %v407
        %v410 = vmul.f32 %v323, %v407
        %v411 = vmul.f32 %v336, %v407
        %415 = vrot.lane.b32.xlu0 %v409, 112
        %v416 = vpop.permute.xlu0 %415
        %417 = vrot.lane.b32.xlu0 %v410, 112
        %v418 = vpop.permute.xlu0 %417
        %419 = vrot.lane.b32.xlu0 %v411, 112
        %v420 = vpop.permute.xlu0 %419
        %v421 = vsel %vm365, %v416, %v418
        %v422 = vsel %vm365, %v418, %v420
        %v425 = vadd.f32 %v403, %v421
        %v426 = vadd.f32 %v404, %v422
        %427 = vset.pattern.permute.xlu0 6
        %428 = vperm.xlu0 %427, %v339
        %v429 = vpop.permute.xlu0 %428
        %v431 = vmul.f32 %v310, %v429
        %v432 = vmul.f32 %v323, %v429
        %v433 = vmul.f32 %v336, %v429
        %437 = vrot.lane.b32.xlu0 %v431, 96
        %v438 = vpop.permute.xlu0 %437
        %439 = vrot.lane.b32.xlu0 %v432, 96
        %v440 = vpop.permute.xlu0 %439
        %441 = vrot.lane.b32.xlu0 %v433, 96
        %v442 = vpop.permute.xlu0 %441
        %v443 = vsel %vm390, %v438, %v440
        %v444 = vsel %vm390, %v440, %v442
        %v447 = vadd.f32 %v425, %v443
        %v448 = vadd.f32 %v426, %v444
        %v450 = vperm.slane %v340, 0
        %v451 = vperm.slane %v340, 2
        %v454 = vperm.slane %v450, 0
        %v455 = vperm.slane %v451, 0
        %v456 = vmul.f32 %v454, %v447
        %v457 = vmul.f32 %v455, %v448
        %460 = vrot.lane.b32.xlu0 %v456, 1
        %v461 = vpop.permute.xlu0 %460
        %462 = vrot.lane.b32.xlu0 %v457, 1
        %v463 = vpop.permute.xlu0 %462
        %vm464 = vcmask 7168
        %v465 = vsel %vm464, %v461, %v463
        %v469 = vadd.f32 %v396, %v461
        %v470 = vadd.f32 %v397, %v465
        %v471 = vadd.f32 %v398, %v463
        %472 = vset.pattern.permute.xlu0 2
        %473 = vperm.xlu0 %472, %v339
        %v474 = vpop.permute.xlu0 %473
        %v476 = vmul.f32 %v310, %v474
        %v477 = vmul.f32 %v323, %v474
        %v478 = vmul.f32 %v336, %v474
        %479 = vset.pattern.permute.xlu0 5
        %480 = vperm.xlu0 %479, %v339
        %v481 = vpop.permute.xlu0 %480
        %v483 = vmul.f32 %v310, %v481
        %v484 = vmul.f32 %v323, %v481
        %v485 = vmul.f32 %v336, %v481
        %489 = vrot.lane.b32.xlu0 %v483, 112
        %v490 = vpop.permute.xlu0 %489
        %491 = vrot.lane.b32.xlu0 %v484, 112
        %v492 = vpop.permute.xlu0 %491
        %493 = vrot.lane.b32.xlu0 %v485, 112
        %v494 = vpop.permute.xlu0 %493
        %v495 = vsel %vm365, %v490, %v492
        %v496 = vsel %vm365, %v492, %v494
        %v500 = vadd.f32 %v476, %v495
        %v501 = vadd.f32 %v477, %v496
        %v502 = vadd.f32 %v478, %v494
        %503 = vset.pattern.permute.xlu0 8
        %504 = vperm.xlu0 %503, %v339
        %v505 = vpop.permute.xlu0 %504
        %v507 = vmul.f32 %v310, %v505
        %v508 = vmul.f32 %v323, %v505
        %v509 = vmul.f32 %v336, %v505
        %513 = vrot.lane.b32.xlu0 %v507, 96
        %v514 = vpop.permute.xlu0 %513
        %515 = vrot.lane.b32.xlu0 %v508, 96
        %v516 = vpop.permute.xlu0 %515
        %517 = vrot.lane.b32.xlu0 %v509, 96
        %v518 = vpop.permute.xlu0 %517
        %v519 = vsel %vm390, %v514, %v516
        %v520 = vsel %vm390, %v516, %v518
        %v524 = vadd.f32 %v500, %v519
        %v525 = vadd.f32 %v501, %v520
        %v526 = vadd.f32 %v502, %v518
        %v527 = vperm.slane %v340, 1
        %v528 = vperm.slane %v340, 3
        %v531 = vperm.slane %v527, 1
        %v532 = vperm.slane %v528, 1
        %536 = vrot.lane.b32.xlu0 %v524, 126
        %v537 = vpop.permute.xlu0 %536
        %538 = vrot.lane.b32.xlu0 %v525, 126
        %v539 = vpop.permute.xlu0 %538
        %540 = vrot.lane.b32.xlu0 %v526, 126
        %v541 = vpop.permute.xlu0 %540
        %vm542 = vcmask 1031168
        %v543 = vsel %vm542, %v537, %v539
        %v544 = vsel %vm542, %v539, %v541
        %v547 = vmul.f32 %v531, %v543
        %v548 = vmul.f32 %v532, %v544
        %551 = vrot.lane.b32.xlu0 %v547, 1
        %v552 = vpop.permute.xlu0 %551
        %553 = vrot.lane.b32.xlu0 %v548, 1
        %v554 = vpop.permute.xlu0 %553
        %v555 = vsel %vm464, %v552, %v554
        %v559 = vadd.f32 %v469, %v552
        %v560 = vadd.f32 %v470, %v555
        %v561 = vadd.f32 %v471, %v554
        %v562 = vld [vmem:[%s3] sm:$0xff]
        %564 = vset.pattern.permute.xlu0 0
        %565 = vperm.xlu0 %564, %v562
        %v566 = vpop.permute.xlu0 %565
        %v568 = vadd.f32 %v559, %v566
        %v569 = vadd.f32 %v560, %v566
        %v570 = vadd.f32 %v561, %v566
        %v571 = vmax.f32 %v568, 0.0
        %v572 = vmax.f32 %v569, 0.0
        %v573 = vmax.f32 %v570, 0.0
        %577 = vrot.lane.b32.xlu0 %v571, 127
        %v578 = vpop.permute.xlu0 %577
        %579 = vrot.lane.b32.xlu0 %v572, 127
        %v580 = vpop.permute.xlu0 %579
        %581 = vrot.lane.b32.xlu0 %v573, 127
        %v582 = vpop.permute.xlu0 %581
        %vm583 = vcmask 1039360
        %v584 = vsel %vm583, %v578, %v580
        %v585 = vsel %vm583, %v580, %v582
        %588 = vst [vmem:[%s260] sm:$0xff] %v584
        %589 = vst [vmem:[%s260 + $0x8] sm:$0xff] %v585
        %s590 = sand.u32 %s156, 1
        %s591 = scalar_lea.sflag [#allocation4], %s590
        %s592 = sand.u32 %s156, 1
        %s593 = smul.addr %s592, 16
        %s594 = scalar_lea.vmem [#allocation5], %s593
        // Predicated region
        $region45: #{tpu_custom_call.1} parent=39 // pred_check
          %p595 = pneg %p166
        $region46: #{tpu_custom_call.1} parent=39 // pred_check_branch
          %597 = sbr.rel (%p595) target = $region48
        $region47: #{tpu_custom_call.1} parent=39 // pred_region
          %s598 = smul.u32 2, %s27
          %600 = vsyncadd %s591, 0
          %s601 = smul.addr %s26, 2
          %s602 = sadd.s32 %s598, %s601
          %s603 = smul.addr %s602, 8
          %s604 = scalar_lea.hbm %s5, %s603
          %s606 = sshll.u32 %s594, 4
          %s607 = int_to_ptr.vmem [resolvable:$true] %s606
          %s608 = sshll.u32 %s604, 4
          %s609 = int_to_ptr.hbm [resolvable:$true] %s608
          %611 = dma.vmem_to_hbm [thread:$0]  %s607, 256, %s609, %s591
        $region48: #{tpu_custom_call.1} parent=39 // pred_fallthru
          _
      $region40: #{tpu_custom_call.1} parent=5 // pred_fallthru
        _
      %p612 = scmp.le.s32.totalorder 2, %s17
      // Predicated region
      $region49: #{tpu_custom_call.1} parent=5 // pred_check
        %p613 = pneg %p612
      $region50: #{tpu_custom_call.1} parent=5 // pred_check_branch
        %615 = sbr.rel (%p613) target = $region52
      $region51: #{tpu_custom_call.1} parent=5 // pred_region
        %s616 = ssub.s32 %s17, 2
        // Predicated region
        $region53: #{tpu_custom_call.1} parent=51 // pred_check
          %p617 = pneg %p172
        $region54: #{tpu_custom_call.1} parent=51 // pred_check_branch
          %619 = sbr.rel (%p617) target = $region56
        $region55: #{tpu_custom_call.1} parent=51 // pred_region
          %s620 = sand.u32 %s157, 1
          %s621 = scalar_lea.sflag [#allocation4], %s620
          %s622 = sand.u32 %s157, 1
          %s623 = smul.addr %s622, 16
          %s624 = scalar_lea.vmem [#allocation5], %s623
          %626 = dma.done %s621, 256
        $region56: #{tpu_custom_call.1} parent=51 // pred_fallthru
          _
      $region52: #{tpu_custom_call.1} parent=5 // pred_fallthru
        _
    $region6: #{tpu_custom_call.1} parent=1 // loop_footer
      %s21 = sadd.s32 1, %s17
    $region7: #{tpu_custom_call.1} parent=1 // loop_footer_branch
      %16 = sbr.rel target = $region3
    $region8: #{tpu_custom_call.1} parent=1 // loop_exit
      _
    %627 = vsyncpa [#allocation3], 1
    %s628 = scalar_lea.sflag [#allocation3], 1
    %629 = vsyncpa %s628, 1
    %630 = vsyncpa [#allocation4], 1
    %s631 = scalar_lea.sflag [#allocation4], 1
    %632 = vsyncpa %s631, 1

</llo_original>
